<compile_context>
chip_gen: v7x
topology: tpu7x:2x2x1
jax: 0.10.0
libtpu: 0.0.40
codegen_flags: <defaults>
</compile_context>

<pallas_src>
import functools

import jax
import jax.numpy as jnp
from jax.experimental import pallas as pl
from jax.experimental.pallas import tpu as pltpu

LANE = 128
SUBLANE = 8


def _round_up(x, m):
    return (x + m - 1) // m * m


# ----------------------- Pallas kernel -----------------------
def _sccl_kernel(ent_ids_ref, ids_ref, ent_emb_ref, tok_table_ref, w_pool_ref,
                 b_pool_ref, out_ref, acc_ref, *, bt, seq, vp, ep, inv_seq, cdt):
    k = pl.program_id(1)

    @pl.when(k == 0)
    def _init():
        # Only the KGE accumulator needs zeroing; the cls half of the output is
        # fully overwritten in the epilogue.
        acc_ref[...] = jnp.zeros_like(acc_ref)

    # --- KGE branch: ent_ids @ entity_embedding_matrix, K-tiled f32 accumulation
    #     in VMEM scratch (no per-k RMW of the output tile). ---
    acc_ref[...] += jnp.dot(
        ent_ids_ref[...], ent_emb_ref[...], preferred_element_type=jnp.float32
    )

    @pl.when(k == pl.num_programs(1) - 1)
    def _epilogue():
        # --- "BERT" stand-in: mean pool of token embeddings as a token-count
        #     matmul on the MXU. Counts are built with per-position 2-D compares
        #     (no [bt, S, Vp] 3-D intermediate), all in f32 (v5e-friendly), with
        #     a single bf16 cast right before each MXU dot. ---
        ids = ids_ref[...]                                              # [bt, S] int32
        lane_iota = jax.lax.broadcasted_iota(jnp.int32, (bt, vp), 1)    # [bt, Vp]
        counts = jnp.zeros((bt, vp), jnp.float32)
        # TODO(synk): for realistic vocab sizes replace this one-hot count with a
        # row gather (scalar-prefetched ids + pl.Element index map / DMA gather).
        for s in range(seq):                                            # static unroll (S small)
            counts = counts + (ids[:, s:s + 1] == lane_iota).astype(jnp.float32)
        counts = counts * inv_seq                                       # rows sum to 1.0 (f32)

        pooled = jnp.dot(counts.astype(cdt), tok_table_ref[...],
                         preferred_element_type=jnp.float32)            # [bt, Hp] f32
        # pooler dense + tanh; bias added exactly in f32 (no bias-lane rounding).
        cls = jnp.tanh(jnp.dot(pooled.astype(cdt), w_pool_ref[...],
                               preferred_element_type=jnp.float32)
                       + b_pool_ref[...])                               # [bt, Hp]

        # fused concat: [ kge | cls ] at lane-aligned column offsets, single store.
        out_ref[:, :ep] = acc_ref[...]
        out_ref[:, ep:] = cls


# ----------------------- Param padding -----------------------
def pad_params_for_kernel(params, compute_dtype=jnp.bfloat16):
    ent_emb, tok_table = params["ent_emb"], params["tok_table"]
    w_pool, b_pool = params["w_pool"], params["b_pool"]
    N, E = ent_emb.shape
    V, H = tok_table.shape
    Np, Ep = _round_up(N, LANE), _round_up(E, LANE)
    Vp, Hp = _round_up(V, LANE), _round_up(H, LANE)

    ent_emb_p = jnp.zeros((Np, Ep), jnp.float32).at[:N, :E].set(ent_emb)
    tok_table_p = jnp.zeros((Vp, Hp), jnp.float32).at[:V, :H].set(tok_table)
    w_pool_p = jnp.zeros((Hp, Hp), jnp.float32).at[:H, :H].set(w_pool)
    b_pool_p = jnp.zeros((1, Hp), jnp.float32).at[:, :H].set(b_pool)     # stays f32 (exact add)

    return {
        "ent_emb": ent_emb_p.astype(compute_dtype),
        "tok_table": tok_table_p.astype(compute_dtype),
        "w_pool": w_pool_p.astype(compute_dtype),
        "b_pool": b_pool_p,
        "dims": (N, E, V, H, Np, Ep, Vp, Hp),
        "compute_dtype": compute_dtype,
    }


# ----------------------- Wrapper -----------------------
def sccl_fused_call(kparams, ent_ids, text_ids, *,
                    batch_tile_target=256, k_tile_target=512):
    """Fused forward for a (possibly stacked) batch: returns [B, E + H]."""
    N, E, V, H, Np, Ep, Vp, Hp = kparams["dims"]
    cdt = kparams["compute_dtype"]
    B, n = ent_ids.shape
    assert n == N
    S = text_ids.shape[1]

    # --- adaptive batch tile: MXU-friendly target, clamped to the real batch ---
    bt = min(batch_tile_target, _round_up(B, SUBLANE))
    bt = _round_up(bt, SUBLANE)
    Bp = _round_up(B, bt)
    # v7x has 2 TensorCores: keep >= 2 "parallel" batch tiles whenever B allows it.
    if Bp // bt < 2 and B > SUBLANE:
        bt = _round_up((B + 1) // 2, SUBLANE)
        Bp = _round_up(B, bt)

    # --- adaptive K tile over the padded entity dim (divisor of Np) ---
    kt = min(k_tile_target, Np)
    while Np % kt:
        kt -= LANE

    # --- VMEM budget derived per generation (v5e/v6e 128 MiB, v7x 64 MiB) ---
    try:
        vmem_cap = pltpu.get_tpu_info().vmem_capacity_bytes
    except Exception:
        vmem_cap = 64 * 1024 * 1024
    vmem_limit = min(int(vmem_cap * 0.8), 100 * 1024 * 1024)

    # Single-buffer the constant-index weight operands only when their
    # double-buffered residency would eat a big chunk of VMEM (v7x / real vocab).
    itemsize = jnp.dtype(cdt).itemsize
    weight_bytes = (Vp * Hp + Hp * Hp) * itemsize
    single_buffer_weights = 2 * weight_bytes > vmem_limit // 4

    def _weight_spec(shape):
        if single_buffer_weights:
            return pl.BlockSpec(shape, lambda b, k: (0, 0), pipeline_mode=pl.Buffered(1))
        return pl.BlockSpec(shape, lambda b, k: (0, 0))

    # zero-pad batch to Bp, entity dim to Np (lane-dense, unmasked loads)
    ent_ids_p = jnp.zeros((Bp, Np), jnp.float32).at[:B, :N].set(ent_ids).astype(cdt)
    ids_p = jnp.zeros((Bp, S), jnp.int32).at[:B, :].set(text_ids)

    nb = Bp // bt
    nk = Np // kt
    W = Ep + Hp

    kern = functools.partial(_sccl_kernel, bt=bt, seq=S, vp=Vp, ep=Ep,
                             inv_seq=1.0 / S, cdt=cdt)

    out = pl.pallas_call(
        kern,
        out_shape=jax.ShapeDtypeStruct((Bp, W), jnp.float32),
        grid=(nb, nk),
        in_specs=[
            pl.BlockSpec((bt, kt), lambda b, k: (b, k)),      # ent_ids (soft weights)
            pl.BlockSpec((bt, S), lambda b, k: (b, 0)),       # token ids (int32)
            pl.BlockSpec((kt, Ep), lambda b, k: (k, 0)),      # entity embedding K-tile
            _weight_spec((Vp, Hp)),                           # token table
            _weight_spec((Hp, Hp)),                           # pooler weight
            pl.BlockSpec((1, Hp), lambda b, k: (0, 0)),       # pooler bias (f32)
        ],
        out_specs=pl.BlockSpec((bt, W), lambda b, k: (b, 0)),
        scratch_shapes=[pltpu.VMEM((bt, Ep), jnp.float32)],   # f32 KGE accumulator
        compiler_params=pltpu.CompilerParams(
            dimension_semantics=("parallel", "arbitrary"),
            vmem_limit_bytes=vmem_limit,
        ),
    )(ent_ids_p, ids_p, kparams["ent_emb"], kparams["tok_table"],
      kparams["w_pool"], kparams["b_pool"])

    # concat was fused in-kernel at lane-aligned offsets; strip the zero padding.
    kge = out[:B, :E]
    cls = out[:B, Ep:Ep + H]
    return jnp.concatenate([kge, cls], axis=1)


def sccl_forward(kparams, orig_ent_ids, noised_ent_ids, orig_text, noised_text,
                 task_type="explicit"):
    if task_type == "evaluate":
        return sccl_fused_call(kparams, orig_ent_ids, orig_text)
    elif task_type == "explicit":
        # both branches in ONE pallas_call: stack along batch (shares weight DMA + launch)
        B = orig_ent_ids.shape[0]
        ent_ids = jnp.concatenate([orig_ent_ids, noised_ent_ids], axis=0)
        text = jnp.concatenate([orig_text, noised_text], axis=0)
        both = sccl_fused_call(kparams, ent_ids, text)
        return both[:B], both[B:]
    else:
        raise NotImplementedError


# ----------------------- Pure-JAX reference (f32) -----------------------
def sccl_branch_ref(params, ent_ids, text_ids):
    kge = ent_ids @ params["ent_emb"]
    tok_emb = params["tok_table"][text_ids]
    pooled = jnp.mean(tok_emb, axis=1)
    cls = jnp.tanh(pooled @ params["w_pool"] + params["b_pool"])
    return jnp.concatenate([kge, cls], axis=1)


# ----------------------- Main -----------------------
if __name__ == "__main__":
    B, N_ENT, E_KGE = 8, 16, 32     # batch, #entities, KGE emb dim
    S, V, H = 8, 32, 32             # seq len, vocab, "bert" hidden dim

    key = jax.random.PRNGKey(0)
    k1, k2, k3, k4, k5, k6, k7 = jax.random.split(key, 7)

    # Deterministic synthetic parameters (shapes follow module __init__ semantics)
    params = {
        "ent_emb": jax.random.normal(k1, (N_ENT, E_KGE), jnp.float32) * 0.1,
        "tok_table": jax.random.normal(k2, (V, H), jnp.float32) * 0.1,
        "w_pool": jax.random.normal(k3, (H, H), jnp.float32) * 0.1,
        "b_pool": jax.random.normal(k4, (1, H), jnp.float32) * 0.1,
    }
    kparams = pad_params_for_kernel(params, compute_dtype=jnp.bfloat16)

    # Example inputs: soft entity-id weights and token ids
    orig_ent_ids = jax.nn.softmax(jax.random.normal(k5, (B, N_ENT), jnp.float32), axis=-1)
    noised_ent_ids = jax.nn.softmax(jax.random.normal(k6, (B, N_ENT), jnp.float32), axis=-1)
    tk = jax.random.split(k7, 2)
    orig_text = jax.random.randint(tk[0], (B, S), 0, V, jnp.int32)
    noised_text = jax.random.randint(tk[1], (B, S), 0, V, jnp.int32)

    # 'explicit' task: both branches in one fused kernel call
    orig_emb, noised_emb = sccl_forward(
        kparams, orig_ent_ids, noised_ent_ids, orig_text, noised_text, task_type="explicit"
    )
    # 'evaluate' task path
    eval_emb = sccl_forward(
        kparams, orig_ent_ids, noised_ent_ids, orig_text, noised_text, task_type="evaluate"
    )
    jax.block_until_ready((orig_emb, noised_emb, eval_emb))

    # Correctness vs. f32 reference (bf16 MXU operands -> loosened tolerance)
    ref_orig = sccl_branch_ref(params, orig_ent_ids, orig_text)
    ref_noised = sccl_branch_ref(params, noised_ent_ids, noised_text)
    assert orig_emb.shape == (B, E_KGE + H) and noised_emb.shape == (B, E_KGE + H)
    assert eval_emb.shape == (B, E_KGE + H)
    assert jnp.allclose(orig_emb, ref_orig, atol=1e-2, rtol=1e-2)
    assert jnp.allclose(noised_emb, ref_noised, atol=1e-2, rtol=1e-2)
    assert jnp.allclose(eval_emb, ref_orig, atol=1e-2, rtol=1e-2)

    print("KERNEL_OK")
</pallas_src>

<mosaic_0001>
module attributes {stable_mosaic.version = 11 : i64} {
  func.func @_sccl_kernel(%arg0: i32, %arg1: i32, %arg2: memref<8x128xbf16, #tpu.memory_space<vmem>>, %arg3: memref<8x8xi32, #tpu.memory_space<vmem>>, %arg4: memref<128x128xbf16, #tpu.memory_space<vmem>>, %arg5: memref<128x128xbf16, #tpu.memory_space<vmem>>, %arg6: memref<128x128xbf16, #tpu.memory_space<vmem>>, %arg7: memref<1x128xf32, #tpu.memory_space<vmem>>, %arg8: memref<8x256xf32, #tpu.memory_space<vmem>>, %arg9: memref<8x128xf32, #tpu.memory_space<vmem>>) attributes {dimension_semantics = [#tpu.dimension_semantics<parallel>, #tpu.dimension_semantics<arbitrary>], iteration_bounds = array<i64: 2, 1>, scalar_prefetch = 0 : i64, scratch_operands = 1 : i64, tpu.core_type = #tpu.core_type<tc>, window_params = [{transform_indices = @transform_0, window_bounds = array<i64: 8, 128>}, {transform_indices = @transform_1, window_bounds = array<i64: 8, 8>}, {transform_indices = @transform_2, window_bounds = array<i64: 128, 128>}, {pipeline_mode = #tpu.pipeline_mode<synchronous>, transform_indices = @transform_3, window_bounds = array<i64: 128, 128>}, {pipeline_mode = #tpu.pipeline_mode<synchronous>, transform_indices = @transform_4, window_bounds = array<i64: 128, 128>}, {pipeline_mode = #tpu.pipeline_mode<synchronous>, transform_indices = @transform_5, window_bounds = array<i64: 1, 128>}, {transform_indices = @transform_6, window_bounds = array<i64: 8, 256>}]} {
    %c0_i32 = arith.constant 0 : i32
    %0 = arith.cmpi eq, %arg1, %c0_i32 : i32
    %1 = arith.extui %0 : i1 to i32
    %c0_i32_0 = arith.constant 0 : i32
    %2 = arith.cmpi ne, %1, %c0_i32_0 : i32
    scf.if %2 {
      %cst_10 = arith.constant 0.000000e+00 : f32
      %12 = vector.broadcast %cst_10 : f32 to vector<8x128xf32>
      %c0_11 = arith.constant 0 : index
      %c0_12 = arith.constant 0 : index
      %13 = vector.load %arg9[%c0_11, %c0_12] : memref<8x128xf32, #tpu.memory_space<vmem>>, vector<8x128xf32>
      tpu.vector_store %arg9[%c0_11, %c0_12], %12 {strides = array<i32>} : memref<8x128xf32, #tpu.memory_space<vmem>>, vector<8x128xf32>,
    } else {
    }
    %c0 = arith.constant 0 : index
    %c0_1 = arith.constant 0 : index
    %3 = vector.load %arg9[%c0, %c0_1] : memref<8x128xf32, #tpu.memory_space<vmem>>, vector<8x128xf32>
    %c0_2 = arith.constant 0 : index
    %c0_3 = arith.constant 0 : index
    %4 = vector.load %arg2[%c0_2, %c0_3] : memref<8x128xbf16, #tpu.memory_space<vmem>>, vector<8x128xbf16>
    %c0_4 = arith.constant 0 : index
    %c0_5 = arith.constant 0 : index
    %5 = vector.load %arg4[%c0_4, %c0_5] : memref<128x128xbf16, #tpu.memory_space<vmem>>, vector<128x128xbf16>
    %cst = arith.constant dense<0.000000e+00> : vector<8x128xf32>
    %6 = tpu.matmul %4, %5, %cst {dimension_numbers = #tpu.dot_dimension_numbers<[1], [0], [0], [1], [0, 0, 1, 1], [], []>} : vector<8x128xbf16>, vector<128x128xbf16>, vector<8x128xf32> -> vector<8x128xf32>
    %7 = arith.addf %3, %6 : vector<8x128xf32>
    %c0_6 = arith.constant 0 : index
    %c0_7 = arith.constant 0 : index
    %8 = vector.load %arg9[%c0_6, %c0_7] : memref<8x128xf32, #tpu.memory_space<vmem>>, vector<8x128xf32>
    tpu.vector_store %arg9[%c0_6, %c0_7], %7 {strides = array<i32>} : memref<8x128xf32, #tpu.memory_space<vmem>>, vector<8x128xf32>,
    %c0_i32_8 = arith.constant 0 : i32
    %9 = arith.cmpi eq, %arg1, %c0_i32_8 : i32
    %10 = arith.extui %9 : i1 to i32
    %c0_i32_9 = arith.constant 0 : i32
    %11 = arith.cmpi ne, %10, %c0_i32_9 : i32
    scf.if %11 {
      %c0_10 = arith.constant 0 : index
      %c0_11 = arith.constant 0 : index
      %12 = vector.load %arg3[%c0_10, %c0_11] : memref<8x8xi32, #tpu.memory_space<vmem>>, vector<8x8xi32>
      %13 = tpu.iota {dimensions = array<i32: 1>} : vector<8x128xi32>
      %cst_12 = arith.constant 0.000000e+00 : f32
      %14 = vector.broadcast %cst_12 : f32 to vector<8x128xf32>
      %15 = vector.extract_strided_slice %12 {offsets = [0, 0], sizes = [8, 1], strides = [1, 1]} : vector<8x8xi32> to vector<8x1xi32>
      %16 = vector.broadcast %15 : vector<8x1xi32> to vector<8x128xi32>
      %17 = arith.cmpi eq, %16, %13 : vector<8x128xi32>
      %18 = arith.extui %17 : vector<8x128xi1> to vector<8x128xi32>
      %19 = arith.sitofp %18 : vector<8x128xi32> to vector<8x128xf32>
      %20 = arith.addf %14, %19 : vector<8x128xf32>
      %21 = vector.extract_strided_slice %12 {offsets = [0, 1], sizes = [8, 1], strides = [1, 1]} : vector<8x8xi32> to vector<8x1xi32>
      %22 = vector.broadcast %21 : vector<8x1xi32> to vector<8x128xi32>
      %23 = arith.cmpi eq, %22, %13 : vector<8x128xi32>
      %24 = arith.extui %23 : vector<8x128xi1> to vector<8x128xi32>
      %25 = arith.sitofp %24 : vector<8x128xi32> to vector<8x128xf32>
      %26 = arith.addf %20, %25 : vector<8x128xf32>
      %27 = vector.extract_strided_slice %12 {offsets = [0, 2], sizes = [8, 1], strides = [1, 1]} : vector<8x8xi32> to vector<8x1xi32>
      %28 = vector.broadcast %27 : vector<8x1xi32> to vector<8x128xi32>
      %29 = arith.cmpi eq, %28, %13 : vector<8x128xi32>
      %30 = arith.extui %29 : vector<8x128xi1> to vector<8x128xi32>
      %31 = arith.sitofp %30 : vector<8x128xi32> to vector<8x128xf32>
      %32 = arith.addf %26, %31 : vector<8x128xf32>
      %33 = vector.extract_strided_slice %12 {offsets = [0, 3], sizes = [8, 1], strides = [1, 1]} : vector<8x8xi32> to vector<8x1xi32>
      %34 = vector.broadcast %33 : vector<8x1xi32> to vector<8x128xi32>
      %35 = arith.cmpi eq, %34, %13 : vector<8x128xi32>
      %36 = arith.extui %35 : vector<8x128xi1> to vector<8x128xi32>
      %37 = arith.sitofp %36 : vector<8x128xi32> to vector<8x128xf32>
      %38 = arith.addf %32, %37 : vector<8x128xf32>
      %39 = vector.extract_strided_slice %12 {offsets = [0, 4], sizes = [8, 1], strides = [1, 1]} : vector<8x8xi32> to vector<8x1xi32>
      %40 = vector.broadcast %39 : vector<8x1xi32> to vector<8x128xi32>
      %41 = arith.cmpi eq, %40, %13 : vector<8x128xi32>
      %42 = arith.extui %41 : vector<8x128xi1> to vector<8x128xi32>
      %43 = arith.sitofp %42 : vector<8x128xi32> to vector<8x128xf32>
      %44 = arith.addf %38, %43 : vector<8x128xf32>
      %45 = vector.extract_strided_slice %12 {offsets = [0, 5], sizes = [8, 1], strides = [1, 1]} : vector<8x8xi32> to vector<8x1xi32>
      %46 = vector.broadcast %45 : vector<8x1xi32> to vector<8x128xi32>
      %47 = arith.cmpi eq, %46, %13 : vector<8x128xi32>
      %48 = arith.extui %47 : vector<8x128xi1> to vector<8x128xi32>
      %49 = arith.sitofp %48 : vector<8x128xi32> to vector<8x128xf32>
      %50 = arith.addf %44, %49 : vector<8x128xf32>
      %51 = vector.extract_strided_slice %12 {offsets = [0, 6], sizes = [8, 1], strides = [1, 1]} : vector<8x8xi32> to vector<8x1xi32>
      %52 = vector.broadcast %51 : vector<8x1xi32> to vector<8x128xi32>
      %53 = arith.cmpi eq, %52, %13 : vector<8x128xi32>
      %54 = arith.extui %53 : vector<8x128xi1> to vector<8x128xi32>
      %55 = arith.sitofp %54 : vector<8x128xi32> to vector<8x128xf32>
      %56 = arith.addf %50, %55 : vector<8x128xf32>
      %57 = vector.extract_strided_slice %12 {offsets = [0, 7], sizes = [8, 1], strides = [1, 1]} : vector<8x8xi32> to vector<8x1xi32>
      %58 = vector.broadcast %57 : vector<8x1xi32> to vector<8x128xi32>
      %59 = arith.cmpi eq, %58, %13 : vector<8x128xi32>
      %60 = arith.extui %59 : vector<8x128xi1> to vector<8x128xi32>
      %61 = arith.sitofp %60 : vector<8x128xi32> to vector<8x128xf32>
      %62 = arith.addf %56, %61 : vector<8x128xf32>
      %cst_13 = arith.constant 1.250000e-01 : f32
      %63 = vector.broadcast %cst_13 : f32 to vector<8x128xf32>
      %64 = arith.mulf %62, %63 : vector<8x128xf32>
      %65 = arith.truncf %64 : vector<8x128xf32> to vector<8x128xbf16>
      %c0_14 = arith.constant 0 : index
      %c0_15 = arith.constant 0 : index
      %66 = vector.load %arg5[%c0_14, %c0_15] : memref<128x128xbf16, #tpu.memory_space<vmem>>, vector<128x128xbf16>
      %cst_16 = arith.constant dense<0.000000e+00> : vector<8x128xf32>
      %67 = tpu.matmul %65, %66, %cst_16 {dimension_numbers = #tpu.dot_dimension_numbers<[1], [0], [0], [1], [0, 0, 1, 1], [], []>} : vector<8x128xbf16>, vector<128x128xbf16>, vector<8x128xf32> -> vector<8x128xf32>
      %68 = arith.truncf %67 : vector<8x128xf32> to vector<8x128xbf16>
      %c0_17 = arith.constant 0 : index
      %c0_18 = arith.constant 0 : index
      %69 = vector.load %arg6[%c0_17, %c0_18] : memref<128x128xbf16, #tpu.memory_space<vmem>>, vector<128x128xbf16>
      %cst_19 = arith.constant dense<0.000000e+00> : vector<8x128xf32>
      %70 = tpu.matmul %68, %69, %cst_19 {dimension_numbers = #tpu.dot_dimension_numbers<[1], [0], [0], [1], [0, 0, 1, 1], [], []>} : vector<8x128xbf16>, vector<128x128xbf16>, vector<8x128xf32> -> vector<8x128xf32>
      %c0_20 = arith.constant 0 : index
      %c0_21 = arith.constant 0 : index
      %71 = vector.load %arg7[%c0_20, %c0_21] : memref<1x128xf32, #tpu.memory_space<vmem>>, vector<1x128xf32>
      %72 = vector.broadcast %71 : vector<1x128xf32> to vector<8x128xf32>
      %73 = arith.addf %70, %72 : vector<8x128xf32>
      %74 = math.tanh %73 : vector<8x128xf32>
      %c0_22 = arith.constant 0 : index
      %c0_23 = arith.constant 0 : index
      %75 = vector.load %arg9[%c0_22, %c0_23] : memref<8x128xf32, #tpu.memory_space<vmem>>, vector<8x128xf32>
      %c0_24 = arith.constant 0 : index
      %c0_25 = arith.constant 0 : index
      %76 = vector.load %arg8[%c0_24, %c0_25] : memref<8x256xf32, #tpu.memory_space<vmem>>, vector<8x128xf32>
      tpu.vector_store %arg8[%c0_24, %c0_25], %75 {strides = array<i32>} : memref<8x256xf32, #tpu.memory_space<vmem>>, vector<8x128xf32>,
      %c0_26 = arith.constant 0 : index
      %c128 = arith.constant 128 : index
      %77 = vector.load %arg8[%c0_26, %c128] : memref<8x256xf32, #tpu.memory_space<vmem>>, vector<8x128xf32>
      tpu.vector_store %arg8[%c0_26, %c128], %74 {strides = array<i32>} : memref<8x256xf32, #tpu.memory_space<vmem>>, vector<8x128xf32>,
    } else {
    }
    return
  }
  func.func @transform_0(%arg0: i32, %arg1: i32) -> (i32, i32) {
    %c0_i32 = arith.constant 0 : i32
    return %arg0, %arg1 : i32, i32
  }
  func.func @transform_1(%arg0: i32, %arg1: i32) -> (i32, i32) {
    %c0_i32 = arith.constant 0 : i32
    %c0_i32_0 = arith.constant 0 : i32
    return %arg0, %c0_i32 : i32, i32
  }
  func.func @transform_2(%arg0: i32, %arg1: i32) -> (i32, i32) {
    %c0_i32 = arith.constant 0 : i32
    %c0_i32_0 = arith.constant 0 : i32
    return %arg1, %c0_i32 : i32, i32
  }
  func.func @transform_3(%arg0: i32, %arg1: i32) -> (i32, i32) {
    %c0_i32 = arith.constant 0 : i32
    %c0_i32_0 = arith.constant 0 : i32
    %c0_i32_1 = arith.constant 0 : i32
    return %c0_i32, %c0_i32_0 : i32, i32
  }
  func.func @transform_4(%arg0: i32, %arg1: i32) -> (i32, i32) {
    %c0_i32 = arith.constant 0 : i32
    %c0_i32_0 = arith.constant 0 : i32
    %c0_i32_1 = arith.constant 0 : i32
    return %c0_i32, %c0_i32_0 : i32, i32
  }
  func.func @transform_5(%arg0: i32, %arg1: i32) -> (i32, i32) {
    %c0_i32 = arith.constant 0 : i32
    %c0_i32_0 = arith.constant 0 : i32
    %c0_i32_1 = arith.constant 0 : i32
    return %c0_i32, %c0_i32_0 : i32, i32
  }
  func.func @transform_6(%arg0: i32, %arg1: i32) -> (i32, i32) {
    %c0_i32 = arith.constant 0 : i32
    %c0_i32_0 = arith.constant 0 : i32
    return %arg0, %c0_i32 : i32, i32
  }
}

</mosaic_0001>

<llo_original>
// kernel: tpu_custom_call.1
$region0: #{tpu_custom_call.1}
  #allocation0 [shape = 'u32[]', space=smem, size = 0x4, offset = 0x4, fixed_abs, tag = 'smem constant byte address 0x4 - core index']
  #allocation1 [shape = 'u32[144,128]{1,0:T(1,128)}', space=vmem, size = 0x12000, scoped, tag = 'internal scratch']
  #allocation2 [shape = 'f32[8,128]{1,0:T(8,128)}', space=vmem, size = 0x1000, scoped, tag = 'scratch operand']
  %s0 = inlined_call_operand.vmem [shape: bf16[16,128], index: 0, kind: input, shape index: {}]
  %s1 = inlined_call_operand.vmem [shape: s32[16,8], index: 1, kind: input, shape index: {}]
  %s2 = inlined_call_operand.hbm [shape: bf16[128,128], index: 2, kind: input, shape index: {}]
  %s3 = inlined_call_operand.hbm [shape: bf16[128,128], index: 3, kind: input, shape index: {}]
  %s4 = inlined_call_operand.hbm [shape: bf16[128,128], index: 4, kind: input, shape index: {}]
  %s5 = inlined_call_operand.vmem [shape: f32[1,128], index: 5, kind: input, shape index: {}]
  %s6 = inlined_call_operand.hbm [shape: f32[16,256], index: 6, kind: output, shape index: {}]
  %s7 = sld [smem:[#allocation0]]
  $region77: #{tpu_custom_call.1} parent=0
    _
  %s9 = ssub.s32 1, %s7
  %s10 = scalar_select 0, %s9, %s7
  $region1: #{tpu_custom_call.1} parent=0
    #allocation3 [shape = 'u8[32768]{0}', space=vmem, size = 0x8000, scoped, tag = 'input window, operand 2, single buffered']
    #allocation4 [shape = 's32[2]{0}', space=sflag, size = 0x8, scoped, tag = 'scoped memory for tpu_custom_call.1']
    #allocation5 [shape = 's32[2]{0}', space=sflag, size = 0x8, scoped, tag = 'scoped memory for tpu_custom_call.1']
    #allocation6 [shape = 'u8[32768]{0}', space=vmem, size = 0x8000, scoped, tag = 'input window, operand 3, single buffered']
    #allocation7 [shape = 's32[1]{0}', space=sflag, size = 0x4, scoped, tag = 'scoped memory for tpu_custom_call.1']
    #allocation8 [shape = 'u8[32768]{0}', space=vmem, size = 0x8000, scoped, tag = 'input window, operand 4, single buffered']
    #allocation9 [shape = 'u8[16384]{0}', space=vmem, size = 0x4000, scoped, tag = 'output window, operand 0']
    %11 = vsyncpa [#allocation4], 0
    %12 = vsyncpa [#allocation7], 0
    %13 = vsyncpa [#allocation5], 0
    %s14 = scalar_lea.sflag [#allocation5], 1
    %15 = vsyncpa %s14, 0
    loop: start=0, step=1, limit=4
    $region2: #{tpu_custom_call.1} parent=1 // loop_pre_header
      _
    $region3: #{tpu_custom_call.1} parent=1 // loop_header
      %s17 = sphi 0, %s21
      %p18 = scmp.ge.s32.totalorder %s17, 4
      %s24 = sphi 0, %s36
      %s25 = sphi 0, %s32
      %s26 = sphi 0, %s24
      %s27 = sphi 0, %s25
      %s28 = sphi 0, %s26
      %s29 = sphi 0, %s27
      %s41 = sphi 0, %s43
      %s44 = sphi 0, %s41
      %s45 = sphi 0, %s44
      %s61 = sphi 0, %s45
      %s67 = sphi 0, %s69
      %s70 = sphi 0, %s67
      %s71 = sphi 0, %s70
      %s87 = sphi 0, %s71
      %s93 = sphi 0, %s95
      %s96 = sphi 0, %s93
      %s97 = sphi 0, %s96
      %s113 = sphi 0, %s97
      %s117 = sphi 0, %s117
      %s119 = sphi 0, %s117
      %s120 = sphi 0, %s119
      %s134 = sphi 0, %s120
      %s138 = sphi 0, %s138
      %s140 = sphi 0, %s138
      %s141 = sphi 0, %s140
      %s155 = sphi 0, %s141
      %s159 = sphi 0, %s159
      %s161 = sphi 0, %s159
      %s162 = sphi 0, %s161
      %s176 = sphi 0, %s162
      %s182 = sphi 0, %s184
      %s185 = sphi 0, %s182
      %s186 = sphi 0, %s185
      %s202 = sphi 0, %s186
    $region4: #{tpu_custom_call.1} parent=1 // loop_header_branch
      %20 = sbr.rel (%p18) target = $region8
    $region5: #{tpu_custom_call.1} parent=1 // loop_body
      %s22 = ssub.s32 %s17, 1
      %s23 = ssub.s32 %s17, 2
      %s30 = sadd.s32 1, %s25
      %p31 = scmp.ge.s32.totalorder %s30, 1
      %s32 = scalar_select %p31, 0, %s30
      %s33 = sadd.s32 1, %s24
      %s34 = scalar_select %p31, %s33, %s24
      %p35 = scmp.ge.s32.totalorder %s34, 2
      %s36 = scalar_select %p35, 0, %s34
      %s37 = ssub.s32 %s24, %s36
      %s38 = ssub.s32 %s25, %s32
      %s39 = sor.u32 %s37, %s38
      %p40 = scmp.eq.s32.totalorder %s39, 0
      %s42 = sadd.s32 %s41, 1
      %s43 = scalar_select %p40, %s41, %s42
      %p46 = pneg %p40
      %p47 = scmp.eq.s32.totalorder %s17, 1
      %p48 = por %p46, %p47
      %p49 = scmp.ne.s32.totalorder %s41, %s44
      %p50 = scmp.eq.s32.totalorder %s17, 0
      %p51 = por %p49, %p50
      %p52 = scmp.ne.s32.totalorder %s41, %s44
      %p53 = scmp.eq.s32.totalorder %s22, 1
      %p54 = por %p52, %p53
      %p55 = scmp.ne.s32.totalorder %s44, %s45
      %p56 = scmp.eq.s32.totalorder %s22, 0
      %p57 = por %p55, %p56
      %p58 = scmp.ne.s32.totalorder %s44, %s45
      %p59 = scmp.eq.s32.totalorder %s23, 1
      %p60 = por %p58, %p59
      %p62 = scmp.ne.s32.totalorder %s45, %s61
      %p63 = scmp.eq.s32.totalorder %s23, 0
      %p64 = por %p62, %p63
      %s65 = ssub.s32 %s24, %s36
      %p66 = scmp.eq.s32.totalorder %s65, 0
      %s68 = sadd.s32 %s67, 1
      %s69 = scalar_select %p66, %s67, %s68
      %p72 = pneg %p66
      %p73 = scmp.eq.s32.totalorder %s17, 1
      %p74 = por %p72, %p73
      %p75 = scmp.ne.s32.totalorder %s67, %s70
      %p76 = scmp.eq.s32.totalorder %s17, 0
      %p77 = por %p75, %p76
      %p78 = scmp.ne.s32.totalorder %s67, %s70
      %p79 = scmp.eq.s32.totalorder %s22, 1
      %p80 = por %p78, %p79
      %p81 = scmp.ne.s32.totalorder %s70, %s71
      %p82 = scmp.eq.s32.totalorder %s22, 0
      %p83 = por %p81, %p82
      %p84 = scmp.ne.s32.totalorder %s70, %s71
      %p85 = scmp.eq.s32.totalorder %s23, 1
      %p86 = por %p84, %p85
      %p88 = scmp.ne.s32.totalorder %s71, %s87
      %p89 = scmp.eq.s32.totalorder %s23, 0
      %p90 = por %p88, %p89
      %s91 = ssub.s32 %s25, %s32
      %p92 = scmp.eq.s32.totalorder %s91, 0
      %s94 = sadd.s32 %s93, 1
      %s95 = scalar_select %p92, %s93, %s94
      %p98 = pneg %p92
      %p99 = scmp.eq.s32.totalorder %s17, 1
      %p100 = por %p98, %p99
      %p101 = scmp.ne.s32.totalorder %s93, %s96
      %p102 = scmp.eq.s32.totalorder %s17, 0
      %p103 = por %p101, %p102
      %p104 = scmp.ne.s32.totalorder %s93, %s96
      %p105 = scmp.eq.s32.totalorder %s22, 1
      %p106 = por %p104, %p105
      %p107 = scmp.ne.s32.totalorder %s96, %s97
      %p108 = scmp.eq.s32.totalorder %s22, 0
      %p109 = por %p107, %p108
      %p110 = scmp.ne.s32.totalorder %s96, %s97
      %p111 = scmp.eq.s32.totalorder %s23, 1
      %p112 = por %p110, %p111
      %p114 = scmp.ne.s32.totalorder %s97, %s113
      %p115 = scmp.eq.s32.totalorder %s23, 0
      %p116 = por %p114, %p115
      %s118 = sadd.s32 %s117, 1
      %p121 = scmp.eq.s32.totalorder %s17, 1
      %p122 = scmp.ne.s32.totalorder %s117, %s119
      %p123 = scmp.eq.s32.totalorder %s17, 0
      %p124 = por %p122, %p123
      %p125 = scmp.ne.s32.totalorder %s117, %s119
      %p126 = scmp.eq.s32.totalorder %s22, 1
      %p127 = por %p125, %p126
      %p128 = scmp.ne.s32.totalorder %s119, %s120
      %p129 = scmp.eq.s32.totalorder %s22, 0
      %p130 = por %p128, %p129
      %p131 = scmp.ne.s32.totalorder %s119, %s120
      %p132 = scmp.eq.s32.totalorder %s23, 1
      %p133 = por %p131, %p132
      %p135 = scmp.ne.s32.totalorder %s120, %s134
      %p136 = scmp.eq.s32.totalorder %s23, 0
      %p137 = por %p135, %p136
      %s139 = sadd.s32 %s138, 1
      %p142 = scmp.eq.s32.totalorder %s17, 1
      %p143 = scmp.ne.s32.totalorder %s138, %s140
      %p144 = scmp.eq.s32.totalorder %s17, 0
      %p145 = por %p143, %p144
      %p146 = scmp.ne.s32.totalorder %s138, %s140
      %p147 = scmp.eq.s32.totalorder %s22, 1
      %p148 = por %p146, %p147
      %p149 = scmp.ne.s32.totalorder %s140, %s141
      %p150 = scmp.eq.s32.totalorder %s22, 0
      %p151 = por %p149, %p150
      %p152 = scmp.ne.s32.totalorder %s140, %s141
      %p153 = scmp.eq.s32.totalorder %s23, 1
      %p154 = por %p152, %p153
      %p156 = scmp.ne.s32.totalorder %s141, %s155
      %p157 = scmp.eq.s32.totalorder %s23, 0
      %p158 = por %p156, %p157
      %s160 = sadd.s32 %s159, 1
      %p163 = scmp.eq.s32.totalorder %s17, 1
      %p164 = scmp.ne.s32.totalorder %s159, %s161
      %p165 = scmp.eq.s32.totalorder %s17, 0
      %p166 = por %p164, %p165
      %p167 = scmp.ne.s32.totalorder %s159, %s161
      %p168 = scmp.eq.s32.totalorder %s22, 1
      %p169 = por %p167, %p168
      %p170 = scmp.ne.s32.totalorder %s161, %s162
      %p171 = scmp.eq.s32.totalorder %s22, 0
      %p172 = por %p170, %p171
      %p173 = scmp.ne.s32.totalorder %s161, %s162
      %p174 = scmp.eq.s32.totalorder %s23, 1
      %p175 = por %p173, %p174
      %p177 = scmp.ne.s32.totalorder %s162, %s176
      %p178 = scmp.eq.s32.totalorder %s23, 0
      %p179 = por %p177, %p178
      %s180 = ssub.s32 %s24, %s36
      %p181 = scmp.eq.s32.totalorder %s180, 0
      %s183 = sadd.s32 %s182, 1
      %s184 = scalar_select %p181, %s182, %s183
      %p187 = pneg %p181
      %p188 = scmp.eq.s32.totalorder %s17, 1
      %p189 = por %p187, %p188
      %p190 = scmp.ne.s32.totalorder %s182, %s185
      %p191 = scmp.eq.s32.totalorder %s17, 0
      %p192 = por %p190, %p191
      %p193 = scmp.ne.s32.totalorder %s182, %s185
      %p194 = scmp.eq.s32.totalorder %s22, 1
      %p195 = por %p193, %p194
      %p196 = scmp.ne.s32.totalorder %s185, %s186
      %p197 = scmp.eq.s32.totalorder %s22, 0
      %p198 = por %p196, %p197
      %p199 = scmp.ne.s32.totalorder %s185, %s186
      %p200 = scmp.eq.s32.totalorder %s23, 1
      %p201 = por %p199, %p200
      %p203 = scmp.ne.s32.totalorder %s186, %s202
      %p204 = scmp.eq.s32.totalorder %s23, 0
      %p205 = por %p203, %p204
      %p206 = scmp.le.s32.totalorder 1, %s17
      %p207 = scmp.lt.s32.totalorder %s17, 3
      %p208 = pnand %p206, %p207
      %p209 = pneg %p208
      // Predicated region
      $region9: #{tpu_custom_call.1} parent=5 // pred_check
        _
      $region10: #{tpu_custom_call.1} parent=5 // pred_check_branch
        %211 = sbr.rel (%p208) target = $region12
      $region11: #{tpu_custom_call.1} parent=5 // pred_region
        %s212 = ssub.s32 %s17, 1
        // Predicated region
        $region13: #{tpu_custom_call.1} parent=11 // pred_check
          %p213 = pneg %p109
        $region14: #{tpu_custom_call.1} parent=11 // pred_check_branch
          %215 = sbr.rel (%p213) target = $region16
        $region15: #{tpu_custom_call.1} parent=11 // pred_region
          %s216 = smul.u32 16, %s27
          %s218 = ssub.s32 1024, 1024
          %219 = vsyncadd [#allocation4], %s218
          %s220 = smul.addr %s216, 64
          %s221 = scalar_lea.hbm %s2, %s220
          %s222 = sshll.u32 [#allocation3], 4
          %s223 = int_to_ptr.vmem [resolvable:$true] %s222
          %228 = dma.hbm_to_vmem [thread:$0]  %s221, 1024, %s223, [#allocation4], 64, 64, 4
        $region16: #{tpu_custom_call.1} parent=11 // pred_fallthru
          _
        // Predicated region
        $region17: #{tpu_custom_call.1} parent=11 // pred_check
          %p229 = pneg %p130
        $region18: #{tpu_custom_call.1} parent=11 // pred_check_branch
          %231 = sbr.rel (%p229) target = $region20
        $region19: #{tpu_custom_call.1} parent=11 // pred_region
          %s233 = ssub.s32 1024, 1024
          %234 = vsyncadd [#allocation7], %s233
          %s235 = sshll.u32 [#allocation6], 4
          %s236 = int_to_ptr.vmem [resolvable:$true] %s235
          %241 = dma.hbm_to_vmem [thread:$0]  %s3, 1024, %s236, [#allocation7], 64, 64, 4
        $region20: #{tpu_custom_call.1} parent=11 // pred_fallthru
          _
        // Predicated region
        $region21: #{tpu_custom_call.1} parent=11 // pred_check
          %p242 = pneg %p151
        $region22: #{tpu_custom_call.1} parent=11 // pred_check_branch
          %244 = sbr.rel (%p242) target = $region24
        $region23: #{tpu_custom_call.1} parent=11 // pred_region
          %s246 = ssub.s32 1024, 1024
          %247 = vsyncadd [#allocation7], %s246
          %s248 = sshll.u32 [#allocation8], 4
          %s249 = int_to_ptr.vmem [resolvable:$true] %s248
          %254 = dma.hbm_to_vmem [thread:$0]  %s4, 1024, %s249, [#allocation7], 64, 64, 4
        $region24: #{tpu_custom_call.1} parent=11 // pred_fallthru
          _
        // Predicated region
        $region25: #{tpu_custom_call.1} parent=11 // pred_check
          %p255 = pneg %p172
        $region26: #{tpu_custom_call.1} parent=11 // pred_check_branch
          %257 = sbr.rel (%p255) target = $region28
        $region27: #{tpu_custom_call.1} parent=11 // pred_region
          _
        $region28: #{tpu_custom_call.1} parent=11 // pred_fallthru
          _
      $region12: #{tpu_custom_call.1} parent=5 // pred_fallthru
        _
      %p258 = scmp.lt.s32.totalorder %s17, 2
      // Predicated region
      $region29: #{tpu_custom_call.1} parent=5 // pred_check
        %p259 = pneg %p258
      $region30: #{tpu_custom_call.1} parent=5 // pred_check_branch
        %261 = sbr.rel (%p259) target = $region32
      $region31: #{tpu_custom_call.1} parent=5 // pred_region
        // Predicated region
        $region33: #{tpu_custom_call.1} parent=31 // pred_check
          %p262 = pneg %p51
        $region34: #{tpu_custom_call.1} parent=31 // pred_check_branch
          %264 = sbr.rel (%p262) target = $region36
        $region35: #{tpu_custom_call.1} parent=31 // pred_region
          %p265 = scmp.lt.s32.totalorder %s24, 1
          %s266 = scalar_select %p265, %s24, 1
          %p267 = scmp.lt.s32.totalorder %s25, 0
          %s268 = scalar_select %p267, %s25, 0
          %s269 = sadd.s32 %s268, %s266
          %s270 = smul.addr %s269, 4
          %s271 = scalar_lea.vmem %s0, %s270
        $region36: #{tpu_custom_call.1} parent=31 // pred_fallthru
          _
        // Predicated region
        $region37: #{tpu_custom_call.1} parent=31 // pred_check
          %p272 = pneg %p77
        $region38: #{tpu_custom_call.1} parent=31 // pred_check_branch
          %274 = sbr.rel (%p272) target = $region40
        $region39: #{tpu_custom_call.1} parent=31 // pred_region
          %p275 = scmp.lt.s32.totalorder %s24, 1
          %s276 = scalar_select %p275, %s24, 1
          %s277 = smul.addr %s276, 8
          %s278 = scalar_lea.vmem %s1, %s277
        $region40: #{tpu_custom_call.1} parent=31 // pred_fallthru
          _
      $region32: #{tpu_custom_call.1} parent=5 // pred_fallthru
        _
      %p279 = scmp.le.s32.totalorder 1, %s17
      %p280 = scmp.lt.s32.totalorder %s17, 3
      %p281 = pnand %p279, %p280
      %p282 = pneg %p281
      // Predicated region
      $region41: #{tpu_custom_call.1} parent=5 // pred_check
        _
      $region42: #{tpu_custom_call.1} parent=5 // pred_check_branch
        %284 = sbr.rel (%p281) target = $region44
      $region43: #{tpu_custom_call.1} parent=5 // pred_region
        %s285 = ssub.s32 %s17, 1
        // Predicated region
        $region45: #{tpu_custom_call.1} parent=43 // pred_check
          %p286 = pneg %p109
        $region46: #{tpu_custom_call.1} parent=43 // pred_check_branch
          %288 = sbr.rel (%p286) target = $region48
        $region47: #{tpu_custom_call.1} parent=43 // pred_region
          %289 = dma.done [#allocation4], 1024
        $region48: #{tpu_custom_call.1} parent=43 // pred_fallthru
          _
        // Predicated region
        $region49: #{tpu_custom_call.1} parent=43 // pred_check
          %p290 = pneg %p130
        $region50: #{tpu_custom_call.1} parent=43 // pred_check_branch
          %292 = sbr.rel (%p290) target = $region52
        $region51: #{tpu_custom_call.1} parent=43 // pred_region
          %293 = dma.done [#allocation7], 1024
        $region52: #{tpu_custom_call.1} parent=43 // pred_fallthru
          _
        // Predicated region
        $region53: #{tpu_custom_call.1} parent=43 // pred_check
          %p294 = pneg %p151
        $region54: #{tpu_custom_call.1} parent=43 // pred_check_branch
          %296 = sbr.rel (%p294) target = $region56
        $region55: #{tpu_custom_call.1} parent=43 // pred_region
          %297 = dma.done [#allocation7], 1024
        $region56: #{tpu_custom_call.1} parent=43 // pred_fallthru
          _
        %p298 = scmp.lt.s32.totalorder %s26, 1
        %s299 = scalar_select %p298, %s26, 1
        %p300 = scmp.lt.s32.totalorder %s27, 0
        %s301 = scalar_select %p300, %s27, 0
        %s302 = sadd.s32 %s301, %s299
        %s303 = smul.addr %s302, 4
        %s304 = scalar_lea.vmem %s0, %s303
        %p305 = pneg %p57
        %p306 = pneg %p54
        %p307 = scmp.lt.s32.totalorder %s26, 1
        %s308 = scalar_select %p307, %s26, 1
        %s309 = smul.addr %s308, 8
        %s310 = scalar_lea.vmem %s1, %s309
        %p311 = pneg %p83
        %p312 = pneg %p80
        %p313 = pneg %p109
        %p314 = pneg %p106
        %p315 = pneg %p130
        %p316 = pneg %p127
        %p317 = pneg %p151
        %p318 = pneg %p148
        %p319 = pneg %p172
        %p320 = pneg %p169
        %p321 = pneg %p198
        %p322 = pneg %p195
        %s323 = sand.u32 %s185, 1
        %s324 = scalar_lea.sflag [#allocation5], %s323
        %s325 = sand.u32 %s185, 1
        %s326 = smul.addr %s325, 16
        %s327 = scalar_lea.vmem [#allocation9], %s326
        %p328 = scmp.lt.s32.totalorder %s26, 1
        %s329 = scalar_select %p328, %s26, 1
        %p330 = scmp.lt.s32.totalorder %s27, 0
        %s331 = scalar_select %p330, %s27, 0
        %s332 = sadd.s32 %s331, %s329
        %s333 = smul.addr %s332, 4
        %s334 = scalar_lea.vmem %s0, %s333
        %p335 = scmp.lt.s32.totalorder %s26, 1
        %s336 = scalar_select %p335, %s26, 1
        %s337 = smul.addr %s336, 8
        %s338 = scalar_lea.vmem %s1, %s337
        %s339 = smul.u32 16, %s27
        %p341 = scmp.eq.s32.totalorder %s27, 0
        // Predicated region
        $region57: #{tpu_custom_call.1} parent=43 // pred_check
          %p342 = pneg %p341
        $region58: #{tpu_custom_call.1} parent=43 // pred_check_branch
          %344 = sbr.rel (%p342) target = $region60
        $region59: #{tpu_custom_call.1} parent=43 // pred_region
          %345 = vst [vmem:[#allocation2] sm:$0xff] 0.0
        $region60: #{tpu_custom_call.1} parent=43 // pred_fallthru
          _
        %v346 = vld [vmem:[#allocation2] sm:$0xff]
        %v347 = vld [vmem:[%s334] sm:$0xf]
        %v348 = vld [vmem:[#allocation3] sm:$0xf]
        %v349 = vld [vmem:[#allocation3 + $0x4] sm:$0xf]
        %v350 = vld [vmem:[#allocation3 + $0x8] sm:$0xf]
        %v351 = vld [vmem:[#allocation3 + $0xc] sm:$0xf]
        %v352 = vld [vmem:[#allocation3 + $0x10] sm:$0xf]
        %v353 = vld [vmem:[#allocation3 + $0x14] sm:$0xf]
        %v354 = vld [vmem:[#allocation3 + $0x18] sm:$0xf]
        %v355 = vld [vmem:[#allocation3 + $0x1c] sm:$0xf]
        %v356 = vld [vmem:[#allocation3 + $0x20] sm:$0xf]
        %v357 = vld [vmem:[#allocation3 + $0x24] sm:$0xf]
        %v358 = vld [vmem:[#allocation3 + $0x28] sm:$0xf]
        %v359 = vld [vmem:[#allocation3 + $0x2c] sm:$0xf]
        %v360 = vld [vmem:[#allocation3 + $0x30] sm:$0xf]
        %v361 = vld [vmem:[#allocation3 + $0x34] sm:$0xf]
        %v362 = vld [vmem:[#allocation3 + $0x38] sm:$0xf]
        %v363 = vld [vmem:[#allocation3 + $0x3c] sm:$0xf]
        %v380 = vunpack.c.l.b16 %v348
        %v381 = vunpack.c.l.b16 %v349
        %v382 = vunpack.c.l.b16 %v350
        %v383 = vunpack.c.l.b16 %v351
        %v384 = vunpack.c.l.b16 %v352
        %v385 = vunpack.c.l.b16 %v353
        %v386 = vunpack.c.l.b16 %v354
        %v387 = vunpack.c.l.b16 %v355
        %v388 = vunpack.c.l.b16 %v356
        %v389 = vunpack.c.l.b16 %v357
        %v390 = vunpack.c.l.b16 %v358
        %v391 = vunpack.c.l.b16 %v359
        %v392 = vunpack.c.l.b16 %v360
        %v393 = vunpack.c.l.b16 %v361
        %v394 = vunpack.c.l.b16 %v362
        %v395 = vunpack.c.l.b16 %v363
        %v396 = vpack.c.b16 %v381, %v380
        %v397 = vpack.c.b16 %v383, %v382
        %v398 = vpack.c.b16 %v385, %v384
        %v399 = vpack.c.b16 %v387, %v386
        %v400 = vpack.c.b16 %v389, %v388
        %v401 = vpack.c.b16 %v391, %v390
        %v402 = vpack.c.b16 %v393, %v392
        %v403 = vpack.c.b16 %v395, %v394
        %412 = vmatprep.subr.bf16.mxu0 0
        %413 = vmatpush1.bf16.msra.mxu0 %v396
        %414 = vmatprep.subr.bf16.mxu0 0
        %415 = vmatpush1.bf16.msra.mxu0 %v397
        %416 = vmatprep.subr.bf16.mxu0 0
        %417 = vmatpush1.bf16.msra.mxu0 %v398
        %418 = vmatprep.subr.bf16.mxu0 0
        %419 = vmatpush1.bf16.msra.mxu0 %v399
        %420 = vmatprep.subr.bf16.mxu0 0
        %421 = vmatpush1.bf16.msra.mxu0 %v400
        %422 = vmatprep.subr.bf16.mxu0 0
        %423 = vmatpush1.bf16.msra.mxu0 %v401
        %424 = vmatprep.subr.bf16.mxu0 0
        %425 = vmatpush1.bf16.msra.mxu0 %v402
        %426 = vmatprep.subr.bf16.mxu0 0
        %427 = vmatpush1.bf16.msra.mxu0 %v403
        %428 = vmatprep.subr.bf16.mxu0 0
        %429 = vmatpush1.bf16.msra.mxu0 0
        %430 = vmatprep.subr.bf16.mxu0 0
        %431 = vmatpush1.bf16.msra.mxu0 0
        %432 = vmatprep.subr.bf16.mxu0 0
        %433 = vmatpush1.bf16.msra.mxu0 0
        %434 = vmatprep.subr.bf16.mxu0 0
        %435 = vmatpush1.bf16.msra.mxu0 0
        %436 = vmatprep.subr.bf16.mxu0 0
        %437 = vmatpush1.bf16.msra.mxu0 0
        %438 = vmatprep.subr.bf16.mxu0 0
        %439 = vmatpush1.bf16.msra.mxu0 0
        %440 = vmatprep.subr.bf16.mxu0 0
        %441 = vmatpush1.bf16.msra.mxu0 0
        %442 = vmatprep.subr.bf16.mxu0 0
        %443 = vmatpush1.bf16.msra.mxu0 0
        %444 = vmatprep.mubr.bf16.mxu0 0
        %445 = vmatmul.mubr.bf16.gmra.mrb[0].mxu0 %v347
        %v446 = vpop.f32.mrb[0].mxu0
        %v447 = vadd.f32 0.0, %v446
        %v448 = vpop.f32.mrb[0].mxu0
        %v449 = vpop.f32.mrb[0].mxu0
        %v450 = vpop.f32.mrb[0].mxu0
        %451 = vdwg.mxu0
        %v452 = vadd.f32 %v346, %v447
        %453 = vst [vmem:[#allocation2] sm:$0xff] %v452
        // Predicated region
        $region61: #{tpu_custom_call.1} parent=43 // pred_check
          %p454 = pneg %p341
        $region62: #{tpu_custom_call.1} parent=43 // pred_check_branch
          %456 = sbr.rel (%p454) target = $region64
        $region63: #{tpu_custom_call.1} parent=43 // pred_region
          %v457 = vld [vmem:[%s338] sm:$0xff]
          %v458 = vlaneseq
          %v459 = vand.u32 %v458, 127
          %460 = vset.pattern.permute.xlu0 0
          %461 = vperm.xlu0 %460, %v457
          %v462 = vpop.permute.xlu0 %461
          %vm463 = vcmp.eq.s32.totalorder %v462, %v459
          %v464 = vsel %vm463, 1, 0
          %v465 = vcvt.s32.f32 %v464
          %v466 = vadd.f32 %v465, 0.0
          %467 = vset.pattern.permute.xlu0 1
          %468 = vperm.xlu0 %467, %v457
          %v469 = vpop.permute.xlu0 %468
          %vm470 = vcmp.eq.s32.totalorder %v469, %v459
          %v471 = vsel %vm470, 1, 0
          %v472 = vcvt.s32.f32 %v471
          %v473 = vadd.f32 %v466, %v472
          %474 = vset.pattern.permute.xlu0 2
          %475 = vperm.xlu0 %474, %v457
          %v476 = vpop.permute.xlu0 %475
          %vm477 = vcmp.eq.s32.totalorder %v476, %v459
          %v478 = vsel %vm477, 1, 0
          %v479 = vcvt.s32.f32 %v478
          %v480 = vadd.f32 %v473, %v479
          %481 = vset.pattern.permute.xlu0 3
          %482 = vperm.xlu0 %481, %v457
          %v483 = vpop.permute.xlu0 %482
          %vm484 = vcmp.eq.s32.totalorder %v483, %v459
          %v485 = vsel %vm484, 1, 0
          %v486 = vcvt.s32.f32 %v485
          %v487 = vadd.f32 %v480, %v486
          %488 = vset.pattern.permute.xlu0 4
          %489 = vperm.xlu0 %488, %v457
          %v490 = vpop.permute.xlu0 %489
          %vm491 = vcmp.eq.s32.totalorder %v490, %v459
          %v492 = vsel %vm491, 1, 0
          %v493 = vcvt.s32.f32 %v492
          %v494 = vadd.f32 %v487, %v493
          %495 = vset.pattern.permute.xlu0 5
          %496 = vperm.xlu0 %495, %v457
          %v497 = vpop.permute.xlu0 %496
          %vm498 = vcmp.eq.s32.totalorder %v497, %v459
          %v499 = vsel %vm498, 1, 0
          %v500 = vcvt.s32.f32 %v499
          %v501 = vadd.f32 %v494, %v500
          %502 = vset.pattern.permute.xlu0 6
          %503 = vperm.xlu0 %502, %v457
          %v504 = vpop.permute.xlu0 %503
          %vm505 = vcmp.eq.s32.totalorder %v504, %v459
          %v506 = vsel %vm505, 1, 0
          %v507 = vcvt.s32.f32 %v506
          %v508 = vadd.f32 %v501, %v507
          %509 = vset.pattern.permute.xlu0 7
          %510 = vperm.xlu0 %509, %v457
          %v511 = vpop.permute.xlu0 %510
          %vm512 = vcmp.eq.s32.totalorder %v511, %v459
          %v513 = vsel %vm512, 1, 0
          %v514 = vcvt.s32.f32 %v513
          %v515 = vadd.f32 %v508, %v514
          %v516 = vmul.f32 %v515, 0.125
          %v517 = vpack.c.bf16 %v516, %v516
          %v518 = vld [vmem:[#allocation6] sm:$0xf]
          %v519 = vld [vmem:[#allocation6 + $0x4] sm:$0xf]
          %v520 = vld [vmem:[#allocation6 + $0x8] sm:$0xf]
          %v521 = vld [vmem:[#allocation6 + $0xc] sm:$0xf]
          %v522 = vld [vmem:[#allocation6 + $0x10] sm:$0xf]
          %v523 = vld [vmem:[#allocation6 + $0x14] sm:$0xf]
          %v524 = vld [vmem:[#allocation6 + $0x18] sm:$0xf]
          %v525 = vld [vmem:[#allocation6 + $0x1c] sm:$0xf]
          %v526 = vld [vmem:[#allocation6 + $0x20] sm:$0xf]
          %v527 = vld [vmem:[#allocation6 + $0x24] sm:$0xf]
          %v528 = vld [vmem:[#allocation6 + $0x28] sm:$0xf]
          %v529 = vld [vmem:[#allocation6 + $0x2c] sm:$0xf]
          %v530 = vld [vmem:[#allocation6 + $0x30] sm:$0xf]
          %v531 = vld [vmem:[#allocation6 + $0x34] sm:$0xf]
          %v532 = vld [vmem:[#allocation6 + $0x38] sm:$0xf]
          %v533 = vld [vmem:[#allocation6 + $0x3c] sm:$0xf]
          %v550 = vunpack.c.l.b16 %v518
          %v551 = vunpack.c.l.b16 %v519
          %v552 = vunpack.c.l.b16 %v520
          %v553 = vunpack.c.l.b16 %v521
          %v554 = vunpack.c.l.b16 %v522
          %v555 = vunpack.c.l.b16 %v523
          %v556 = vunpack.c.l.b16 %v524
          %v557 = vunpack.c.l.b16 %v525
          %v558 = vunpack.c.l.b16 %v526
          %v559 = vunpack.c.l.b16 %v527
          %v560 = vunpack.c.l.b16 %v528
          %v561 = vunpack.c.l.b16 %v529
          %v562 = vunpack.c.l.b16 %v530
          %v563 = vunpack.c.l.b16 %v531
          %v564 = vunpack.c.l.b16 %v532
          %v565 = vunpack.c.l.b16 %v533
          %v566 = vpack.c.b16 %v551, %v550
          %v567 = vpack.c.b16 %v553, %v552
          %v568 = vpack.c.b16 %v555, %v554
          %v569 = vpack.c.b16 %v557, %v556
          %v570 = vpack.c.b16 %v559, %v558
          %v571 = vpack.c.b16 %v561, %v560
          %v572 = vpack.c.b16 %v563, %v562
          %v573 = vpack.c.b16 %v565, %v564
          %582 = vmatprep.subr.bf16.mxu0 0
          %583 = vmatpush1.bf16.msra.mxu0 %v566
          %584 = vmatprep.subr.bf16.mxu0 0
          %585 = vmatpush1.bf16.msra.mxu0 %v567
          %586 = vmatprep.subr.bf16.mxu0 0
          %587 = vmatpush1.bf16.msra.mxu0 %v568
          %588 = vmatprep.subr.bf16.mxu0 0
          %589 = vmatpush1.bf16.msra.mxu0 %v569
          %590 = vmatprep.subr.bf16.mxu0 0
          %591 = vmatpush1.bf16.msra.mxu0 %v570
          %592 = vmatprep.subr.bf16.mxu0 0
          %593 = vmatpush1.bf16.msra.mxu0 %v571
          %594 = vmatprep.subr.bf16.mxu0 0
          %595 = vmatpush1.bf16.msra.mxu0 %v572
          %596 = vmatprep.subr.bf16.mxu0 0
          %597 = vmatpush1.bf16.msra.mxu0 %v573
          %598 = vmatprep.subr.bf16.mxu0 0
          %599 = vmatpush1.bf16.msra.mxu0 0
          %600 = vmatprep.subr.bf16.mxu0 0
          %601 = vmatpush1.bf16.msra.mxu0 0
          %602 = vmatprep.subr.bf16.mxu0 0
          %603 = vmatpush1.bf16.msra.mxu0 0
          %604 = vmatprep.subr.bf16.mxu0 0
          %605 = vmatpush1.bf16.msra.mxu0 0
          %606 = vmatprep.subr.bf16.mxu0 0
          %607 = vmatpush1.bf16.msra.mxu0 0
          %608 = vmatprep.subr.bf16.mxu0 0
          %609 = vmatpush1.bf16.msra.mxu0 0
          %610 = vmatprep.subr.bf16.mxu0 0
          %611 = vmatpush1.bf16.msra.mxu0 0
          %612 = vmatprep.subr.bf16.mxu0 0
          %613 = vmatpush1.bf16.msra.mxu0 0
          %614 = vmatprep.mubr.bf16.mxu0 0
          %615 = vmatmul.mubr.bf16.gmra.mrb[0].mxu0 %v517
          %v616 = vpop.f32.mrb[0].mxu0
          %v617 = vadd.f32 0.0, %v616
          %v618 = vpop.f32.mrb[0].mxu0
          %v619 = vpop.f32.mrb[0].mxu0
          %v620 = vpop.f32.mrb[0].mxu0
          %621 = vdwg.mxu0
          %v622 = vpack.c.bf16 %v617, %v617
          %v623 = vld [vmem:[#allocation8] sm:$0xf]
          %v624 = vld [vmem:[#allocation8 + $0x4] sm:$0xf]
          %v625 = vld [vmem:[#allocation8 + $0x8] sm:$0xf]
          %v626 = vld [vmem:[#allocation8 + $0xc] sm:$0xf]
          %v627 = vld [vmem:[#allocation8 + $0x10] sm:$0xf]
          %v628 = vld [vmem:[#allocation8 + $0x14] sm:$0xf]
          %v629 = vld [vmem:[#allocation8 + $0x18] sm:$0xf]
          %v630 = vld [vmem:[#allocation8 + $0x1c] sm:$0xf]
          %v631 = vld [vmem:[#allocation8 + $0x20] sm:$0xf]
          %v632 = vld [vmem:[#allocation8 + $0x24] sm:$0xf]
          %v633 = vld [vmem:[#allocation8 + $0x28] sm:$0xf]
          %v634 = vld [vmem:[#allocation8 + $0x2c] sm:$0xf]
          %v635 = vld [vmem:[#allocation8 + $0x30] sm:$0xf]
          %v636 = vld [vmem:[#allocation8 + $0x34] sm:$0xf]
          %v637 = vld [vmem:[#allocation8 + $0x38] sm:$0xf]
          %v638 = vld [vmem:[#allocation8 + $0x3c] sm:$0xf]
          %v639 = vld [vmem:[%s5] sm:$0x1]
          %v641 = vlaneseq
          %v642 = vshrl.u32 %v641, 7
          %v643 = vsub.s32 0, %v642
          %v644 = vrot.slane %v639, %v643
          %v662 = vunpack.c.l.b16 %v623
          %v663 = vunpack.c.l.b16 %v624
          %v664 = vunpack.c.l.b16 %v625
          %v665 = vunpack.c.l.b16 %v626
          %v666 = vunpack.c.l.b16 %v627
          %v667 = vunpack.c.l.b16 %v628
          %v668 = vunpack.c.l.b16 %v629
          %v669 = vunpack.c.l.b16 %v630
          %v670 = vunpack.c.l.b16 %v631
          %v671 = vunpack.c.l.b16 %v632
          %v672 = vunpack.c.l.b16 %v633
          %v673 = vunpack.c.l.b16 %v634
          %v674 = vunpack.c.l.b16 %v635
          %v675 = vunpack.c.l.b16 %v636
          %v676 = vunpack.c.l.b16 %v637
          %v677 = vunpack.c.l.b16 %v638
          %v678 = vpack.c.b16 %v663, %v662
          %v679 = vpack.c.b16 %v665, %v664
          %v680 = vpack.c.b16 %v667, %v666
          %v681 = vpack.c.b16 %v669, %v668
          %v682 = vpack.c.b16 %v671, %v670
          %v683 = vpack.c.b16 %v673, %v672
          %v684 = vpack.c.b16 %v675, %v674
          %v685 = vpack.c.b16 %v677, %v676
          %694 = vmatprep.subr.bf16.mxu0 0
          %695 = vmatpush1.bf16.msra.mxu0 %v678
          %696 = vmatprep.subr.bf16.mxu0 0
          %697 = vmatpush1.bf16.msra.mxu0 %v679
          %698 = vmatprep.subr.bf16.mxu0 0
          %699 = vmatpush1.bf16.msra.mxu0 %v680
          %700 = vmatprep.subr.bf16.mxu0 0
          %701 = vmatpush1.bf16.msra.mxu0 %v681
          %702 = vmatprep.subr.bf16.mxu0 0
          %703 = vmatpush1.bf16.msra.mxu0 %v682
          %704 = vmatprep.subr.bf16.mxu0 0
          %705 = vmatpush1.bf16.msra.mxu0 %v683
          %706 = vmatprep.subr.bf16.mxu0 0
          %707 = vmatpush1.bf16.msra.mxu0 %v684
          %708 = vmatprep.subr.bf16.mxu0 0
          %709 = vmatpush1.bf16.msra.mxu0 %v685
          %710 = vmatprep.subr.bf16.mxu0 0
          %711 = vmatpush1.bf16.msra.mxu0 0
          %712 = vmatprep.subr.bf16.mxu0 0
          %713 = vmatpush1.bf16.msra.mxu0 0
          %714 = vmatprep.subr.bf16.mxu0 0
          %715 = vmatpush1.bf16.msra.mxu0 0
          %716 = vmatprep.subr.bf16.mxu0 0
          %717 = vmatpush1.bf16.msra.mxu0 0
          %718 = vmatprep.subr.bf16.mxu0 0
          %719 = vmatpush1.bf16.msra.mxu0 0
          %720 = vmatprep.subr.bf16.mxu0 0
          %721 = vmatpush1.bf16.msra.mxu0 0
          %722 = vmatprep.subr.bf16.mxu0 0
          %723 = vmatpush1.bf16.msra.mxu0 0
          %724 = vmatprep.subr.bf16.mxu0 0
          %725 = vmatpush1.bf16.msra.mxu0 0
          %726 = vmatprep.mubr.bf16.mxu0 0
          %727 = vmatmul.mubr.bf16.gmra.mrb[0].mxu0 %v622
          %v728 = vpop.f32.mrb[0].mxu0
          %v729 = vadd.f32 %v644, %v728
          %v730 = vpop.f32.mrb[0].mxu0
          %v731 = vpop.f32.mrb[0].mxu0
          %v732 = vpop.f32.mrb[0].mxu0
          %733 = vdwg.mxu0
          %v734 = vtanh.pop %v729
          %v735 = vld [vmem:[#allocation2] sm:$0xff]
          %736 = vst [vmem:[%s327] sm:$0xff] %v735
          %737 = vst [vmem:[%s327 + $0x8] sm:$0xff] %v734
        $region64: #{tpu_custom_call.1} parent=43 // pred_fallthru
          _
        %s738 = sand.u32 %s185, 1
        %s739 = scalar_lea.sflag [#allocation5], %s738
        %s740 = sand.u32 %s185, 1
        %s741 = smul.addr %s740, 16
        %s742 = scalar_lea.vmem [#allocation9], %s741
        // Predicated region
        $region65: #{tpu_custom_call.1} parent=43 // pred_check
          %p743 = pneg %p195
        $region66: #{tpu_custom_call.1} parent=43 // pred_check_branch
          %745 = sbr.rel (%p743) target = $region68
        $region67: #{tpu_custom_call.1} parent=43 // pred_region
          %s747 = ssub.s32 256, 256
          %748 = vsyncadd %s739, %s747
          %s749 = smul.addr %s26, 2
          %s750 = smul.addr %s749, 128
          %s751 = scalar_lea.hbm %s6, %s750
          %s753 = sshll.u32 %s742, 4
          %s754 = int_to_ptr.vmem [resolvable:$true] %s753
          %756 = dma.vmem_to_hbm [thread:$0]  %s754, 256, %s751, %s739
        $region68: #{tpu_custom_call.1} parent=43 // pred_fallthru
          _
      $region44: #{tpu_custom_call.1} parent=5 // pred_fallthru
        _
      %p757 = scmp.le.s32.totalorder 2, %s17
      // Predicated region
      $region69: #{tpu_custom_call.1} parent=5 // pred_check
        %p758 = pneg %p757
      $region70: #{tpu_custom_call.1} parent=5 // pred_check_branch
        %760 = sbr.rel (%p758) target = $region72
      $region71: #{tpu_custom_call.1} parent=5 // pred_region
        %s761 = ssub.s32 %s17, 2
        // Predicated region
        $region73: #{tpu_custom_call.1} parent=71 // pred_check
          %p762 = pneg %p201
        $region74: #{tpu_custom_call.1} parent=71 // pred_check_branch
          %764 = sbr.rel (%p762) target = $region76
        $region75: #{tpu_custom_call.1} parent=71 // pred_region
          %s765 = sand.u32 %s186, 1
          %s766 = scalar_lea.sflag [#allocation5], %s765
          %s767 = sand.u32 %s186, 1
          %s768 = smul.addr %s767, 16
          %s769 = scalar_lea.vmem [#allocation9], %s768
          %770 = dma.done %s766, 256
        $region76: #{tpu_custom_call.1} parent=71 // pred_fallthru
          _
      $region72: #{tpu_custom_call.1} parent=5 // pred_fallthru
        _
    $region6: #{tpu_custom_call.1} parent=1 // loop_footer
      %s21 = sadd.s32 1, %s17
    $region7: #{tpu_custom_call.1} parent=1 // loop_footer_branch
      %16 = sbr.rel target = $region3
    $region8: #{tpu_custom_call.1} parent=1 // loop_exit
      _
    %771 = vsyncpa [#allocation4], 1
    %s772 = scalar_lea.sflag [#allocation4], 1
    %773 = vsyncpa %s772, 1
    %774 = vsyncpa [#allocation7], 1
    %775 = vsyncpa [#allocation5], 1
    %s776 = scalar_lea.sflag [#allocation5], 1
    %777 = vsyncpa %s776, 1

</llo_original>
